<compile_context>
chip_gen: v6e
topology: v6e:2x2x1
jax: 0.10.0
libtpu: 0.0.40
codegen_flags: <defaults>
</compile_context>

<pallas_src>
import functools

import jax
import jax.numpy as jnp
import numpy as np
from jax.experimental import pallas as pl
from jax.experimental.pallas import tpu as pltpu

_LANES = 128
_SUBLANES = 8


def _pad_up(n, m):
    return ((n + m - 1) // m) * m


def _make_kernel(T, Bp):
    """Builds the kernel body for static (seq_len, padded batch)."""

    def kernel(x_ref, wih_t_ref, whh_t_ref, b_ref, wout_t_ref, bout_ref, y_ref):
        # x_ref:      (T*Bp, F)  bf16  time-major flattened input
        # wih_t_ref:  (F, Hp)    bf16  W_ih^T, H zero-padded to 128 lanes
        # whh_t_ref:  (Hp, Hp)   bf16  W_hh^T, zero-padded
        # b_ref:      (1, Hp)    f32   b_ih + b_hh (fused), zero-padded
        # wout_t_ref: (Hp, Op)   bf16  W_out^T, zero-padded
        # bout_ref:   (1, Op)    f32   output bias, zero-padded
        # y_ref:      (Bp, Op)   f32   Linear(h_T), lane-dense
        Hp = whh_t_ref.shape[0]

        # Hoisted input projection: one (T*Bp, F) @ (F, Hp) MXU call for all
        # timesteps, bias folded in -- off the serial critical path.
        pre_all = (
            jnp.dot(x_ref[...], wih_t_ref[...], preferred_element_type=jnp.float32)
            + b_ref[...]
        )                                      # (T*Bp, Hp) f32
        pre_all = pre_all.reshape(T, Bp, Hp)   # free: splits sublane groups of 8

        whh_t = whh_t_ref[...]                 # (Hp, Hp) bf16, loaded once

        # Serial recurrence; h stays register-resident in f32, only the MXU
        # operand is cast to bf16. T is tiny & static -> trace-time unroll.
        h = jnp.zeros((Bp, Hp), dtype=jnp.float32)
        for t in range(T):
            rec = jnp.dot(h.astype(whh_t.dtype), whh_t,
                          preferred_element_type=jnp.float32)
            h = jnp.tanh(pre_all[t] + rec)     # pre_all[t]: contiguous (Bp, Hp)

        # Output projection on the final hidden state (unmasked lane-dense vst).
        y_ref[...] = (
            jnp.dot(h.astype(wout_t_ref.dtype), wout_t_ref[...],
                    preferred_element_type=jnp.float32)
            + bout_ref[...]
        ).astype(y_ref.dtype)

    return kernel


def prepare_params(params, mxu_dtype=jnp.bfloat16):
    """One-time padding/transposition/casting of the weights (hoisted out of
    the per-call forward path). Zero padding keeps the math exact."""
    W_ih, W_hh, b_ih, b_hh, W_out, b_out = (
        params["W_ih"], params["W_hh"], params["b_ih"],
        params["b_hh"], params["W_out"], params["b_out"])
    H, F = W_ih.shape[0], W_ih.shape[1]
    O = W_out.shape[0]
    Hp = _pad_up(H, _LANES)
    Op = _pad_up(O, _LANES)
    f32 = jnp.float32

    wih_t = jnp.zeros((F, Hp), mxu_dtype).at[:, :H].set(W_ih.T.astype(mxu_dtype))
    whh_t = jnp.zeros((Hp, Hp), mxu_dtype).at[:H, :H].set(W_hh.T.astype(mxu_dtype))
    b = jnp.zeros((1, Hp), f32).at[0, :H].set((b_ih + b_hh).astype(f32))
    wout_t = jnp.zeros((Hp, Op), mxu_dtype).at[:H, :O].set(W_out.T.astype(mxu_dtype))
    bout = jnp.zeros((1, Op), f32).at[0, :O].set(b_out.astype(f32))
    return (wih_t, whh_t, b, wout_t, bout)


@functools.partial(jax.jit, static_argnums=(6,))
def textrnn_forward(x, wih_t, whh_t, b, wout_t, bout, out_features):
    """x: (B, T, F) batch-first like the PyTorch module. Returns (1, B, O)."""
    B, T, F = x.shape
    Hp = whh_t.shape[0]
    Op = wout_t.shape[1]
    Bp = _pad_up(B, _SUBLANES)
    mxu_dtype = wih_t.dtype

    # Time-major, sublane-padded batch: (B,T,F) -> (T,Bp,F) -> (T*Bp,F).
    # Tiny array; this prep is off the kernel's serial critical path.
    xt = jnp.transpose(x, (1, 0, 2)).astype(mxu_dtype)
    xt = jnp.zeros((T, Bp, F), mxu_dtype).at[:, :B, :].set(xt)
    x2d = xt.reshape(T * Bp, F)

    vmem = pl.BlockSpec(memory_space=pltpu.MemorySpace.VMEM)
    y_pad = pl.pallas_call(
        _make_kernel(T, Bp),
        out_shape=jax.ShapeDtypeStruct((Bp, Op), jnp.float32),
        in_specs=[vmem, vmem, vmem, vmem, vmem, vmem],
        out_specs=vmem,
    )(x2d, wih_t, whh_t, b, wout_t, bout)

    # PyTorch returns Linear(h) where h has shape (num_layers=1, B, H).
    return y_pad[:B, :out_features].reshape(1, B, out_features)


def init_params(key, in_features, hidden_size, out_features):
    """Deterministic init mimicking PyTorch's U(-1/sqrt(H), 1/sqrt(H))."""
    ks = jax.random.split(key, 6)
    bound = 1.0 / jnp.sqrt(hidden_size)
    u = lambda k, shape: jax.random.uniform(
        k, shape, jnp.float32, minval=-bound, maxval=bound)
    return {
        "W_ih": u(ks[0], (hidden_size, in_features)),
        "W_hh": u(ks[1], (hidden_size, hidden_size)),
        "b_ih": u(ks[2], (hidden_size,)),
        "b_hh": u(ks[3], (hidden_size,)),
        "W_out": u(ks[4], (out_features, hidden_size)),
        "b_out": u(ks[5], (out_features,)),
    }


def _reference_forward(x, params):
    """Pure-JAX f32 reference of the PyTorch module (correctness check)."""
    W_ih, W_hh, b_ih, b_hh, W_out, b_out = (
        params["W_ih"], params["W_hh"], params["b_ih"],
        params["b_hh"], params["W_out"], params["b_out"])
    B, T, F = x.shape
    H = W_hh.shape[0]
    h = jnp.zeros((B, H), jnp.float32)
    for t in range(T):
        h = jnp.tanh(x[:, t, :] @ W_ih.T + b_ih + h @ W_hh.T + b_hh)
    y = h @ W_out.T + b_out
    return y.reshape(1, B, -1)


if __name__ == "__main__":
    B, T, F = 2, 8, 16          # batch, seq len, in_features
    H, O = 64, 8                # hidden_size fixed by the module, out_features

    key = jax.random.PRNGKey(0)
    k_x, k_p = jax.random.split(key)
    x = jax.random.normal(k_x, (B, T, F), dtype=jnp.float32)
    params = init_params(k_p, F, H, O)

    prep = prepare_params(params)                      # one-time weight prep
    y = textrnn_forward(x, *prep, O)
    jax.block_until_ready(y)
    assert y.shape == (1, B, O), y.shape

    y_ref = _reference_forward(x, params)
    # bf16 MXU operands (f32 accumulation) -> tolerance loosened vs pure f32.
    np.testing.assert_allclose(np.asarray(y), np.asarray(y_ref),
                               rtol=2e-2, atol=2e-2)
    print("KERNEL_OK")
</pallas_src>

<mosaic_0001>
module attributes {stable_mosaic.version = 11 : i64} {
  func.func @kernel(%arg0: memref<64x16xbf16, #tpu.memory_space<vmem>>, %arg1: memref<16x128xbf16, #tpu.memory_space<vmem>>, %arg2: memref<128x128xbf16, #tpu.memory_space<vmem>>, %arg3: memref<1x128xf32, #tpu.memory_space<vmem>>, %arg4: memref<128x128xbf16, #tpu.memory_space<vmem>>, %arg5: memref<1x128xf32, #tpu.memory_space<vmem>>, %arg6: memref<8x128xf32, #tpu.memory_space<vmem>>) attributes {dimension_semantics = [], scalar_prefetch = 0 : i64, scratch_operands = 0 : i64, tpu.core_type = #tpu.core_type<tc>} {
    %c0 = arith.constant 0 : index
    %c0_0 = arith.constant 0 : index
    %0 = vector.load %arg0[%c0, %c0_0] : memref<64x16xbf16, #tpu.memory_space<vmem>>, vector<64x16xbf16>
    %c0_1 = arith.constant 0 : index
    %c0_2 = arith.constant 0 : index
    %1 = vector.load %arg1[%c0_1, %c0_2] : memref<16x128xbf16, #tpu.memory_space<vmem>>, vector<16x128xbf16>
    %cst = arith.constant dense<0.000000e+00> : vector<64x128xf32>
    %2 = tpu.matmul %0, %1, %cst {dimension_numbers = #tpu.dot_dimension_numbers<[1], [0], [0], [1], [0, 0, 1, 1], [], []>} : vector<64x16xbf16>, vector<16x128xbf16>, vector<64x128xf32> -> vector<64x128xf32>
    %c0_3 = arith.constant 0 : index
    %c0_4 = arith.constant 0 : index
    %3 = vector.load %arg3[%c0_3, %c0_4] : memref<1x128xf32, #tpu.memory_space<vmem>>, vector<1x128xf32>
    %4 = vector.broadcast %3 : vector<1x128xf32> to vector<64x128xf32>
    %5 = arith.addf %2, %4 : vector<64x128xf32>
    %6 = vector.shape_cast %5 : vector<64x128xf32> to vector<8x8x128xf32>
    %c0_5 = arith.constant 0 : index
    %c0_6 = arith.constant 0 : index
    %7 = vector.load %arg2[%c0_5, %c0_6] : memref<128x128xbf16, #tpu.memory_space<vmem>>, vector<128x128xbf16>
    %cst_7 = arith.constant 0.000000e+00 : f32
    %8 = vector.broadcast %cst_7 : f32 to vector<8x128xf32>
    %9 = arith.truncf %8 : vector<8x128xf32> to vector<8x128xbf16>
    %cst_8 = arith.constant dense<0.000000e+00> : vector<8x128xf32>
    %10 = tpu.matmul %9, %7, %cst_8 {dimension_numbers = #tpu.dot_dimension_numbers<[1], [0], [0], [1], [0, 0, 1, 1], [], []>} : vector<8x128xbf16>, vector<128x128xbf16>, vector<8x128xf32> -> vector<8x128xf32>
    %11 = vector.extract_strided_slice %6 {offsets = [0, 0, 0], sizes = [1, 8, 128], strides = [1, 1, 1]} : vector<8x8x128xf32> to vector<1x8x128xf32>
    %12 = vector.shape_cast %11 : vector<1x8x128xf32> to vector<8x128xf32>
    %13 = arith.addf %12, %10 : vector<8x128xf32>
    %14 = math.tanh %13 : vector<8x128xf32>
    %15 = arith.truncf %14 : vector<8x128xf32> to vector<8x128xbf16>
    %cst_9 = arith.constant dense<0.000000e+00> : vector<8x128xf32>
    %16 = tpu.matmul %15, %7, %cst_9 {dimension_numbers = #tpu.dot_dimension_numbers<[1], [0], [0], [1], [0, 0, 1, 1], [], []>} : vector<8x128xbf16>, vector<128x128xbf16>, vector<8x128xf32> -> vector<8x128xf32>
    %17 = vector.extract_strided_slice %6 {offsets = [1, 0, 0], sizes = [1, 8, 128], strides = [1, 1, 1]} : vector<8x8x128xf32> to vector<1x8x128xf32>
    %18 = vector.shape_cast %17 : vector<1x8x128xf32> to vector<8x128xf32>
    %19 = arith.addf %18, %16 : vector<8x128xf32>
    %20 = math.tanh %19 : vector<8x128xf32>
    %21 = arith.truncf %20 : vector<8x128xf32> to vector<8x128xbf16>
    %cst_10 = arith.constant dense<0.000000e+00> : vector<8x128xf32>
    %22 = tpu.matmul %21, %7, %cst_10 {dimension_numbers = #tpu.dot_dimension_numbers<[1], [0], [0], [1], [0, 0, 1, 1], [], []>} : vector<8x128xbf16>, vector<128x128xbf16>, vector<8x128xf32> -> vector<8x128xf32>
    %23 = vector.extract_strided_slice %6 {offsets = [2, 0, 0], sizes = [1, 8, 128], strides = [1, 1, 1]} : vector<8x8x128xf32> to vector<1x8x128xf32>
    %24 = vector.shape_cast %23 : vector<1x8x128xf32> to vector<8x128xf32>
    %25 = arith.addf %24, %22 : vector<8x128xf32>
    %26 = math.tanh %25 : vector<8x128xf32>
    %27 = arith.truncf %26 : vector<8x128xf32> to vector<8x128xbf16>
    %cst_11 = arith.constant dense<0.000000e+00> : vector<8x128xf32>
    %28 = tpu.matmul %27, %7, %cst_11 {dimension_numbers = #tpu.dot_dimension_numbers<[1], [0], [0], [1], [0, 0, 1, 1], [], []>} : vector<8x128xbf16>, vector<128x128xbf16>, vector<8x128xf32> -> vector<8x128xf32>
    %29 = vector.extract_strided_slice %6 {offsets = [3, 0, 0], sizes = [1, 8, 128], strides = [1, 1, 1]} : vector<8x8x128xf32> to vector<1x8x128xf32>
    %30 = vector.shape_cast %29 : vector<1x8x128xf32> to vector<8x128xf32>
    %31 = arith.addf %30, %28 : vector<8x128xf32>
    %32 = math.tanh %31 : vector<8x128xf32>
    %33 = arith.truncf %32 : vector<8x128xf32> to vector<8x128xbf16>
    %cst_12 = arith.constant dense<0.000000e+00> : vector<8x128xf32>
    %34 = tpu.matmul %33, %7, %cst_12 {dimension_numbers = #tpu.dot_dimension_numbers<[1], [0], [0], [1], [0, 0, 1, 1], [], []>} : vector<8x128xbf16>, vector<128x128xbf16>, vector<8x128xf32> -> vector<8x128xf32>
    %35 = vector.extract_strided_slice %6 {offsets = [4, 0, 0], sizes = [1, 8, 128], strides = [1, 1, 1]} : vector<8x8x128xf32> to vector<1x8x128xf32>
    %36 = vector.shape_cast %35 : vector<1x8x128xf32> to vector<8x128xf32>
    %37 = arith.addf %36, %34 : vector<8x128xf32>
    %38 = math.tanh %37 : vector<8x128xf32>
    %39 = arith.truncf %38 : vector<8x128xf32> to vector<8x128xbf16>
    %cst_13 = arith.constant dense<0.000000e+00> : vector<8x128xf32>
    %40 = tpu.matmul %39, %7, %cst_13 {dimension_numbers = #tpu.dot_dimension_numbers<[1], [0], [0], [1], [0, 0, 1, 1], [], []>} : vector<8x128xbf16>, vector<128x128xbf16>, vector<8x128xf32> -> vector<8x128xf32>
    %41 = vector.extract_strided_slice %6 {offsets = [5, 0, 0], sizes = [1, 8, 128], strides = [1, 1, 1]} : vector<8x8x128xf32> to vector<1x8x128xf32>
    %42 = vector.shape_cast %41 : vector<1x8x128xf32> to vector<8x128xf32>
    %43 = arith.addf %42, %40 : vector<8x128xf32>
    %44 = math.tanh %43 : vector<8x128xf32>
    %45 = arith.truncf %44 : vector<8x128xf32> to vector<8x128xbf16>
    %cst_14 = arith.constant dense<0.000000e+00> : vector<8x128xf32>
    %46 = tpu.matmul %45, %7, %cst_14 {dimension_numbers = #tpu.dot_dimension_numbers<[1], [0], [0], [1], [0, 0, 1, 1], [], []>} : vector<8x128xbf16>, vector<128x128xbf16>, vector<8x128xf32> -> vector<8x128xf32>
    %47 = vector.extract_strided_slice %6 {offsets = [6, 0, 0], sizes = [1, 8, 128], strides = [1, 1, 1]} : vector<8x8x128xf32> to vector<1x8x128xf32>
    %48 = vector.shape_cast %47 : vector<1x8x128xf32> to vector<8x128xf32>
    %49 = arith.addf %48, %46 : vector<8x128xf32>
    %50 = math.tanh %49 : vector<8x128xf32>
    %51 = arith.truncf %50 : vector<8x128xf32> to vector<8x128xbf16>
    %cst_15 = arith.constant dense<0.000000e+00> : vector<8x128xf32>
    %52 = tpu.matmul %51, %7, %cst_15 {dimension_numbers = #tpu.dot_dimension_numbers<[1], [0], [0], [1], [0, 0, 1, 1], [], []>} : vector<8x128xbf16>, vector<128x128xbf16>, vector<8x128xf32> -> vector<8x128xf32>
    %53 = vector.extract_strided_slice %6 {offsets = [7, 0, 0], sizes = [1, 8, 128], strides = [1, 1, 1]} : vector<8x8x128xf32> to vector<1x8x128xf32>
    %54 = vector.shape_cast %53 : vector<1x8x128xf32> to vector<8x128xf32>
    %55 = arith.addf %54, %52 : vector<8x128xf32>
    %56 = math.tanh %55 : vector<8x128xf32>
    %57 = arith.truncf %56 : vector<8x128xf32> to vector<8x128xbf16>
    %c0_16 = arith.constant 0 : index
    %c0_17 = arith.constant 0 : index
    %58 = vector.load %arg4[%c0_16, %c0_17] : memref<128x128xbf16, #tpu.memory_space<vmem>>, vector<128x128xbf16>
    %cst_18 = arith.constant dense<0.000000e+00> : vector<8x128xf32>
    %59 = tpu.matmul %57, %58, %cst_18 {dimension_numbers = #tpu.dot_dimension_numbers<[1], [0], [0], [1], [0, 0, 1, 1], [], []>} : vector<8x128xbf16>, vector<128x128xbf16>, vector<8x128xf32> -> vector<8x128xf32>
    %c0_19 = arith.constant 0 : index
    %c0_20 = arith.constant 0 : index
    %60 = vector.load %arg5[%c0_19, %c0_20] : memref<1x128xf32, #tpu.memory_space<vmem>>, vector<1x128xf32>
    %61 = vector.broadcast %60 : vector<1x128xf32> to vector<8x128xf32>
    %62 = arith.addf %59, %61 : vector<8x128xf32>
    %c0_21 = arith.constant 0 : index
    %c0_22 = arith.constant 0 : index
    %63 = vector.load %arg6[%c0_21, %c0_22] : memref<8x128xf32, #tpu.memory_space<vmem>>, vector<8x128xf32>
    tpu.vector_store %arg6[%c0_21, %c0_22], %62 {strides = array<i32>} : memref<8x128xf32, #tpu.memory_space<vmem>>, vector<8x128xf32>,
    return
  }
}

</mosaic_0001>

<llo_original>
// kernel: textrnn_forward.1
$region0: #{textrnn_forward.1}
  #allocation0 [shape = 'u32[]', space=smem, size = 0x4, offset = 0x4, fixed_abs, tag = 'smem constant byte address 0x4 - core index']
  #allocation1 [shape = 'u32[144,128]{1,0:T(1,128)}', space=vmem, size = 0x12000, scoped, tag = 'internal scratch']
  %s0 = inlined_call_operand.vmem [shape: bf16[64,16], index: 0, kind: input, shape index: {}]
  %s1 = inlined_call_operand.vmem [shape: bf16[16,128], index: 1, kind: input, shape index: {}]
  %s2 = inlined_call_operand.vmem [shape: bf16[128,128], index: 2, kind: input, shape index: {}]
  %s3 = inlined_call_operand.vmem [shape: f32[1,128], index: 3, kind: input, shape index: {}]
  %s4 = inlined_call_operand.hbm [shape: bf16[128,128], index: 4, kind: input, shape index: {}]
  %s5 = inlined_call_operand.vmem [shape: f32[1,128], index: 5, kind: input, shape index: {}]
  %s6 = inlined_call_operand.vmem [shape: f32[8,128], index: 6, kind: output, shape index: {}]
  %s7 = sld [smem:[#allocation0]]
  $region38: #{textrnn_forward.1} parent=0
    _
  %s9 = ssub.s32 1, %s7
  %s10 = scalar_select 0, %s9, %s7
  $region1: #{textrnn_forward.1} parent=0
    #allocation2 [shape = 'u8[32768]{0}', space=vmem, size = 0x8000, scoped, tag = 'input window, operand 4, single buffered']
    #allocation3 [shape = 's32[1]{0}', space=sflag, size = 0x4, scoped, tag = 'scoped memory for textrnn_forward.1']
    %11 = vsyncpa [#allocation3], 0
    // Predicated region
    $region2: #{textrnn_forward.1} parent=1 // pred_check
      _
    $region3: #{textrnn_forward.1} parent=1 // pred_check_branch
      %13 = sbr.rel (0) target = $region5
    $region4: #{textrnn_forward.1} parent=1 // pred_region
      _
    $region5: #{textrnn_forward.1} parent=1 // pred_fallthru
      _
    // Predicated region
    $region6: #{textrnn_forward.1} parent=1 // pred_check
      _
    $region7: #{textrnn_forward.1} parent=1 // pred_check_branch
      %15 = sbr.rel (0) target = $region9
    $region8: #{textrnn_forward.1} parent=1 // pred_region
      _
    $region9: #{textrnn_forward.1} parent=1 // pred_fallthru
      _
    // Predicated region
    $region10: #{textrnn_forward.1} parent=1 // pred_check
      _
    $region11: #{textrnn_forward.1} parent=1 // pred_check_branch
      %17 = sbr.rel (0) target = $region13
    $region12: #{textrnn_forward.1} parent=1 // pred_region
      _
    $region13: #{textrnn_forward.1} parent=1 // pred_fallthru
      _
    // Predicated region
    $region14: #{textrnn_forward.1} parent=1 // pred_check
      _
    $region15: #{textrnn_forward.1} parent=1 // pred_check_branch
      %19 = sbr.rel (0) target = $region17
    $region16: #{textrnn_forward.1} parent=1 // pred_region
      _
    $region17: #{textrnn_forward.1} parent=1 // pred_fallthru
      _
    // Predicated region
    $region18: #{textrnn_forward.1} parent=1 // pred_check
      _
    $region19: #{textrnn_forward.1} parent=1 // pred_check_branch
      %21 = sbr.rel (0) target = $region21
    $region20: #{textrnn_forward.1} parent=1 // pred_region
      %s23 = ssub.s32 1024, 1024
      %24 = vsyncadd [#allocation3], %s23
      %s25 = sshll.u32 [#allocation2], 4
      %s26 = int_to_ptr.vmem [resolvable:$true] %s25
      %31 = dma.hbm_to_vmem [thread:$0]  %s4, 1024, %s26, [#allocation3], 64, 64, 4
    $region21: #{textrnn_forward.1} parent=1 // pred_fallthru
      _
    // Predicated region
    $region22: #{textrnn_forward.1} parent=1 // pred_check
      _
    $region23: #{textrnn_forward.1} parent=1 // pred_check_branch
      %33 = sbr.rel (0) target = $region25
    $region24: #{textrnn_forward.1} parent=1 // pred_region
      _
    $region25: #{textrnn_forward.1} parent=1 // pred_fallthru
      _
    // Predicated region
    $region26: #{textrnn_forward.1} parent=1 // pred_check
      _
    $region27: #{textrnn_forward.1} parent=1 // pred_check_branch
      %35 = sbr.rel (0) target = $region29
    $region28: #{textrnn_forward.1} parent=1 // pred_region
      %36 = dma.done [#allocation3], 1024
    $region29: #{textrnn_forward.1} parent=1 // pred_fallthru
      _
    %v38 = vld [vmem:[%s0] sm:$0xf]
    %v39 = vld [vmem:[%s0 + $0x4] sm:$0xf]
    %v40 = vld [vmem:[%s0 + $0x8] sm:$0xf]
    %v41 = vld [vmem:[%s0 + $0xc] sm:$0xf]
    %v42 = vld [vmem:[%s0 + $0x10] sm:$0xf]
    %v43 = vld [vmem:[%s0 + $0x14] sm:$0xf]
    %v44 = vld [vmem:[%s0 + $0x18] sm:$0xf]
    %v45 = vld [vmem:[%s0 + $0x1c] sm:$0xf]
    %v46 = vld [vmem:[%s1] sm:$0xf]
    %v47 = vld [vmem:[%s1 + $0x4] sm:$0xf]
    %v48 = vld [vmem:[%s3] sm:$0x1]
    %v50 = vlaneseq
    %v51 = vshrl.u32 %v50, 7
    %v52 = vsub.s32 0, %v51
    %v53 = vrot.slane %v48, %v52
    %v63 = vunpack.c.l.b16 %v38
    %v64 = vunpack.c.l.b16 %v39
    %v65 = vunpack.c.l.b16 %v40
    %v66 = vunpack.c.l.b16 %v41
    %v67 = vunpack.c.l.b16 %v42
    %v68 = vunpack.c.l.b16 %v43
    %v69 = vunpack.c.l.b16 %v44
    %v70 = vunpack.c.l.b16 %v45
    %v71 = vpack.c.b16 %v64, %v63
    %v72 = vpack.c.b16 %v66, %v65
    %v73 = vpack.c.b16 %v68, %v67
    %v74 = vpack.c.b16 %v70, %v69
    %v77 = vunpack.c.l.b16 %v46
    %v78 = vunpack.c.l.b16 %v47
    %v79 = vpack.c.b16 %v78, %v77
    %vm81 = vcmask 130048
    %v83 = vsel %vm81, %v71, 0
    %v86 = vsel %vm81, %v72, 0
    %v89 = vsel %vm81, %v73, 0
    %v92 = vsel %vm81, %v74, 0
    %94 = vmatprep.subr.bf16.mxu0 0
    %95 = vmatpush1.bf16.msra.mxu0 0
    %96 = vmatprep.subr.bf16.mxu0 0
    %97 = vmatpush1.bf16.msra.mxu0 0
    %98 = vmatprep.subr.bf16.mxu0 0
    %99 = vmatpush1.bf16.msra.mxu0 0
    %100 = vmatprep.subr.bf16.mxu0 0
    %101 = vmatpush1.bf16.msra.mxu0 0
    %102 = vmatprep.subr.bf16.mxu0 0
    %103 = vmatpush1.bf16.msra.mxu0 0
    %104 = vmatprep.subr.bf16.mxu0 0
    %105 = vmatpush1.bf16.msra.mxu0 0
    %106 = vmatprep.subr.bf16.mxu0 0
    %107 = vmatpush1.bf16.msra.mxu0 0
    %108 = vmatprep.subr.bf16.mxu0 0
    %109 = vmatpush1.bf16.msra.mxu0 %v79
    %110 = vmatprep.subr.bf16.mxu0 0
    %111 = vmatpush2.bf16.msra.mxu0 0
    %112 = vmatprep.subr.bf16.mxu0 0
    %113 = vmatpush2.bf16.msra.mxu0 0
    %114 = vmatprep.subr.bf16.mxu0 0
    %115 = vmatpush2.bf16.msra.mxu0 0
    %116 = vmatprep.subr.bf16.mxu0 0
    %117 = vmatpush2.bf16.msra.mxu0 0
    %118 = vmatprep.subr.bf16.mxu0 0
    %119 = vmatpush2.bf16.msra.mxu0 0
    %120 = vmatprep.subr.bf16.mxu0 0
    %121 = vmatpush2.bf16.msra.mxu0 0
    %122 = vmatprep.subr.bf16.mxu0 0
    %123 = vmatpush2.bf16.msra.mxu0 0
    %124 = vmatprep.subr.bf16.mxu0 0
    %125 = vmatpush2.bf16.msra.mxu0 0
    %126 = vmatprep.mubr.bf16.mxu0 0
    %127 = vmatmul.mubr.bf16.gmra.mxu0 %v83
    %v128 = vpop.f32.mrf.mxu0
    %v129 = vadd.f32 %v53, %v128
    %v130 = vpop.f32.mrf.mxu0
    %v131 = vpop.f32.mrf.mxu0
    %v132 = vadd.f32 %v53, %v131
    %v133 = vpop.f32.mrf.mxu0
    %134 = vmatprep.mubr.bf16.mxu0 0
    %135 = vmatmul.mubr.bf16.gmra.mxu0 %v86
    %v136 = vpop.f32.mrf.mxu0
    %v137 = vadd.f32 %v53, %v136
    %v138 = vpop.f32.mrf.mxu0
    %v139 = vpop.f32.mrf.mxu0
    %v140 = vadd.f32 %v53, %v139
    %v141 = vpop.f32.mrf.mxu0
    %142 = vmatprep.mubr.bf16.mxu0 0
    %143 = vmatmul.mubr.bf16.gmra.mxu0 %v89
    %v144 = vpop.f32.mrf.mxu0
    %v145 = vadd.f32 %v53, %v144
    %v146 = vpop.f32.mrf.mxu0
    %v147 = vpop.f32.mrf.mxu0
    %v148 = vadd.f32 %v53, %v147
    %v149 = vpop.f32.mrf.mxu0
    %150 = vmatprep.mubr.bf16.mxu0 0
    %151 = vmatmul.mubr.bf16.gmra.mxu0 %v92
    %v152 = vpop.f32.mrf.mxu0
    %v153 = vadd.f32 %v53, %v152
    %v154 = vpop.f32.mrf.mxu0
    %v155 = vpop.f32.mrf.mxu0
    %v156 = vadd.f32 %v53, %v155
    %v157 = vpop.f32.mrf.mxu0
    %158 = vdwg.mxu0
    %v159 = vld [vmem:[%s2] sm:$0xf]
    %v160 = vld [vmem:[%s2 + $0x4] sm:$0xf]
    %v161 = vld [vmem:[%s2 + $0x8] sm:$0xf]
    %v162 = vld [vmem:[%s2 + $0xc] sm:$0xf]
    %v163 = vld [vmem:[%s2 + $0x10] sm:$0xf]
    %v164 = vld [vmem:[%s2 + $0x14] sm:$0xf]
    %v165 = vld [vmem:[%s2 + $0x18] sm:$0xf]
    %v166 = vld [vmem:[%s2 + $0x1c] sm:$0xf]
    %v167 = vld [vmem:[%s2 + $0x20] sm:$0xf]
    %v168 = vld [vmem:[%s2 + $0x24] sm:$0xf]
    %v169 = vld [vmem:[%s2 + $0x28] sm:$0xf]
    %v170 = vld [vmem:[%s2 + $0x2c] sm:$0xf]
    %v171 = vld [vmem:[%s2 + $0x30] sm:$0xf]
    %v172 = vld [vmem:[%s2 + $0x34] sm:$0xf]
    %v173 = vld [vmem:[%s2 + $0x38] sm:$0xf]
    %v174 = vld [vmem:[%s2 + $0x3c] sm:$0xf]
    %v191 = vunpack.c.l.b16 %v159
    %v192 = vunpack.c.l.b16 %v160
    %v193 = vunpack.c.l.b16 %v161
    %v194 = vunpack.c.l.b16 %v162
    %v195 = vunpack.c.l.b16 %v163
    %v196 = vunpack.c.l.b16 %v164
    %v197 = vunpack.c.l.b16 %v165
    %v198 = vunpack.c.l.b16 %v166
    %v199 = vunpack.c.l.b16 %v167
    %v200 = vunpack.c.l.b16 %v168
    %v201 = vunpack.c.l.b16 %v169
    %v202 = vunpack.c.l.b16 %v170
    %v203 = vunpack.c.l.b16 %v171
    %v204 = vunpack.c.l.b16 %v172
    %v205 = vunpack.c.l.b16 %v173
    %v206 = vunpack.c.l.b16 %v174
    %v207 = vpack.c.b16 %v192, %v191
    %v208 = vpack.c.b16 %v194, %v193
    %v209 = vpack.c.b16 %v196, %v195
    %v210 = vpack.c.b16 %v198, %v197
    %v211 = vpack.c.b16 %v200, %v199
    %v212 = vpack.c.b16 %v202, %v201
    %v213 = vpack.c.b16 %v204, %v203
    %v214 = vpack.c.b16 %v206, %v205
    %223 = vmatprep.subr.bf16.mxu0 0
    %224 = vmatpush1.bf16.msra.mxu0 %v214
    %225 = vmatprep.subr.bf16.mxu0 0
    %226 = vmatpush1.bf16.msra.mxu0 %v213
    %227 = vmatprep.subr.bf16.mxu0 0
    %228 = vmatpush1.bf16.msra.mxu0 %v212
    %229 = vmatprep.subr.bf16.mxu0 0
    %230 = vmatpush1.bf16.msra.mxu0 %v211
    %231 = vmatprep.subr.bf16.mxu0 0
    %232 = vmatpush1.bf16.msra.mxu0 %v210
    %233 = vmatprep.subr.bf16.mxu0 0
    %234 = vmatpush1.bf16.msra.mxu0 %v209
    %235 = vmatprep.subr.bf16.mxu0 0
    %236 = vmatpush1.bf16.msra.mxu0 %v208
    %237 = vmatprep.subr.bf16.mxu0 0
    %238 = vmatpush1.bf16.msra.mxu0 %v207
    %239 = vmatprep.subr.bf16.mxu0 0
    %240 = vmatpush2.bf16.msra.mxu0 0
    %241 = vmatprep.subr.bf16.mxu0 0
    %242 = vmatpush2.bf16.msra.mxu0 0
    %243 = vmatprep.subr.bf16.mxu0 0
    %244 = vmatpush2.bf16.msra.mxu0 0
    %245 = vmatprep.subr.bf16.mxu0 0
    %246 = vmatpush2.bf16.msra.mxu0 0
    %247 = vmatprep.subr.bf16.mxu0 0
    %248 = vmatpush2.bf16.msra.mxu0 0
    %249 = vmatprep.subr.bf16.mxu0 0
    %250 = vmatpush2.bf16.msra.mxu0 0
    %251 = vmatprep.subr.bf16.mxu0 0
    %252 = vmatpush2.bf16.msra.mxu0 0
    %253 = vmatprep.subr.bf16.mxu0 0
    %254 = vmatpush2.bf16.msra.mxu0 0
    %255 = vmatprep.mubr.bf16.mxu0 0
    %256 = vmatmul.mubr.bf16.gmra.mxu0 0
    %v257 = vpop.f32.mrf.mxu0
    %v258 = vadd.f32 0.0, %v257
    %v259 = vpop.f32.mrf.mxu0
    %v260 = vpop.f32.mrf.mxu0
    %v261 = vpop.f32.mrf.mxu0
    %262 = vdwg.mxu0
    %v263 = vadd.f32 %v129, %v258
    %v264 = vtanh.pop %v263
    %v265 = vpack.c.bf16 %v264, %v264
    %266 = vmatprep.subr.bf16.mxu0 0
    %267 = vmatpush1.bf16.msra.mxu0 %v214
    %268 = vmatprep.subr.bf16.mxu0 0
    %269 = vmatpush1.bf16.msra.mxu0 %v213
    %270 = vmatprep.subr.bf16.mxu0 0
    %271 = vmatpush1.bf16.msra.mxu0 %v212
    %272 = vmatprep.subr.bf16.mxu0 0
    %273 = vmatpush1.bf16.msra.mxu0 %v211
    %274 = vmatprep.subr.bf16.mxu0 0
    %275 = vmatpush1.bf16.msra.mxu0 %v210
    %276 = vmatprep.subr.bf16.mxu0 0
    %277 = vmatpush1.bf16.msra.mxu0 %v209
    %278 = vmatprep.subr.bf16.mxu0 0
    %279 = vmatpush1.bf16.msra.mxu0 %v208
    %280 = vmatprep.subr.bf16.mxu0 0
    %281 = vmatpush1.bf16.msra.mxu0 %v207
    %282 = vmatprep.subr.bf16.mxu0 0
    %283 = vmatpush2.bf16.msra.mxu0 0
    %284 = vmatprep.subr.bf16.mxu0 0
    %285 = vmatpush2.bf16.msra.mxu0 0
    %286 = vmatprep.subr.bf16.mxu0 0
    %287 = vmatpush2.bf16.msra.mxu0 0
    %288 = vmatprep.subr.bf16.mxu0 0
    %289 = vmatpush2.bf16.msra.mxu0 0
    %290 = vmatprep.subr.bf16.mxu0 0
    %291 = vmatpush2.bf16.msra.mxu0 0
    %292 = vmatprep.subr.bf16.mxu0 0
    %293 = vmatpush2.bf16.msra.mxu0 0
    %294 = vmatprep.subr.bf16.mxu0 0
    %295 = vmatpush2.bf16.msra.mxu0 0
    %296 = vmatprep.subr.bf16.mxu0 0
    %297 = vmatpush2.bf16.msra.mxu0 0
    %298 = vmatprep.mubr.bf16.mxu0 0
    %299 = vmatmul.mubr.bf16.gmra.mxu0 %v265
    %v300 = vpop.f32.mrf.mxu0
    %v301 = vadd.f32 0.0, %v300
    %v302 = vpop.f32.mrf.mxu0
    %v303 = vpop.f32.mrf.mxu0
    %v304 = vpop.f32.mrf.mxu0
    %305 = vdwg.mxu0
    %v306 = vadd.f32 %v132, %v301
    %v307 = vtanh.pop %v306
    %v308 = vpack.c.bf16 %v307, %v307
    %309 = vmatprep.subr.bf16.mxu0 0
    %310 = vmatpush1.bf16.msra.mxu0 %v214
    %311 = vmatprep.subr.bf16.mxu0 0
    %312 = vmatpush1.bf16.msra.mxu0 %v213
    %313 = vmatprep.subr.bf16.mxu0 0
    %314 = vmatpush1.bf16.msra.mxu0 %v212
    %315 = vmatprep.subr.bf16.mxu0 0
    %316 = vmatpush1.bf16.msra.mxu0 %v211
    %317 = vmatprep.subr.bf16.mxu0 0
    %318 = vmatpush1.bf16.msra.mxu0 %v210
    %319 = vmatprep.subr.bf16.mxu0 0
    %320 = vmatpush1.bf16.msra.mxu0 %v209
    %321 = vmatprep.subr.bf16.mxu0 0
    %322 = vmatpush1.bf16.msra.mxu0 %v208
    %323 = vmatprep.subr.bf16.mxu0 0
    %324 = vmatpush1.bf16.msra.mxu0 %v207
    %325 = vmatprep.subr.bf16.mxu0 0
    %326 = vmatpush2.bf16.msra.mxu0 0
    %327 = vmatprep.subr.bf16.mxu0 0
    %328 = vmatpush2.bf16.msra.mxu0 0
    %329 = vmatprep.subr.bf16.mxu0 0
    %330 = vmatpush2.bf16.msra.mxu0 0
    %331 = vmatprep.subr.bf16.mxu0 0
    %332 = vmatpush2.bf16.msra.mxu0 0
    %333 = vmatprep.subr.bf16.mxu0 0
    %334 = vmatpush2.bf16.msra.mxu0 0
    %335 = vmatprep.subr.bf16.mxu0 0
    %336 = vmatpush2.bf16.msra.mxu0 0
    %337 = vmatprep.subr.bf16.mxu0 0
    %338 = vmatpush2.bf16.msra.mxu0 0
    %339 = vmatprep.subr.bf16.mxu0 0
    %340 = vmatpush2.bf16.msra.mxu0 0
    %341 = vmatprep.mubr.bf16.mxu0 0
    %342 = vmatmul.mubr.bf16.gmra.mxu0 %v308
    %v343 = vpop.f32.mrf.mxu0
    %v344 = vadd.f32 0.0, %v343
    %v345 = vpop.f32.mrf.mxu0
    %v346 = vpop.f32.mrf.mxu0
    %v347 = vpop.f32.mrf.mxu0
    %348 = vdwg.mxu0
    %v349 = vadd.f32 %v137, %v344
    %v350 = vtanh.pop %v349
    %v351 = vpack.c.bf16 %v350, %v350
    %352 = vmatprep.subr.bf16.mxu0 0
    %353 = vmatpush1.bf16.msra.mxu0 %v214
    %354 = vmatprep.subr.bf16.mxu0 0
    %355 = vmatpush1.bf16.msra.mxu0 %v213
    %356 = vmatprep.subr.bf16.mxu0 0
    %357 = vmatpush1.bf16.msra.mxu0 %v212
    %358 = vmatprep.subr.bf16.mxu0 0
    %359 = vmatpush1.bf16.msra.mxu0 %v211
    %360 = vmatprep.subr.bf16.mxu0 0
    %361 = vmatpush1.bf16.msra.mxu0 %v210
    %362 = vmatprep.subr.bf16.mxu0 0
    %363 = vmatpush1.bf16.msra.mxu0 %v209
    %364 = vmatprep.subr.bf16.mxu0 0
    %365 = vmatpush1.bf16.msra.mxu0 %v208
    %366 = vmatprep.subr.bf16.mxu0 0
    %367 = vmatpush1.bf16.msra.mxu0 %v207
    %368 = vmatprep.subr.bf16.mxu0 0
    %369 = vmatpush2.bf16.msra.mxu0 0
    %370 = vmatprep.subr.bf16.mxu0 0
    %371 = vmatpush2.bf16.msra.mxu0 0
    %372 = vmatprep.subr.bf16.mxu0 0
    %373 = vmatpush2.bf16.msra.mxu0 0
    %374 = vmatprep.subr.bf16.mxu0 0
    %375 = vmatpush2.bf16.msra.mxu0 0
    %376 = vmatprep.subr.bf16.mxu0 0
    %377 = vmatpush2.bf16.msra.mxu0 0
    %378 = vmatprep.subr.bf16.mxu0 0
    %379 = vmatpush2.bf16.msra.mxu0 0
    %380 = vmatprep.subr.bf16.mxu0 0
    %381 = vmatpush2.bf16.msra.mxu0 0
    %382 = vmatprep.subr.bf16.mxu0 0
    %383 = vmatpush2.bf16.msra.mxu0 0
    %384 = vmatprep.mubr.bf16.mxu0 0
    %385 = vmatmul.mubr.bf16.gmra.mxu0 %v351
    %v386 = vpop.f32.mrf.mxu0
    %v387 = vadd.f32 0.0, %v386
    %v388 = vpop.f32.mrf.mxu0
    %v389 = vpop.f32.mrf.mxu0
    %v390 = vpop.f32.mrf.mxu0
    %391 = vdwg.mxu0
    %v392 = vadd.f32 %v140, %v387
    %v393 = vtanh.pop %v392
    %v394 = vpack.c.bf16 %v393, %v393
    %395 = vmatprep.subr.bf16.mxu0 0
    %396 = vmatpush1.bf16.msra.mxu0 %v214
    %397 = vmatprep.subr.bf16.mxu0 0
    %398 = vmatpush1.bf16.msra.mxu0 %v213
    %399 = vmatprep.subr.bf16.mxu0 0
    %400 = vmatpush1.bf16.msra.mxu0 %v212
    %401 = vmatprep.subr.bf16.mxu0 0
    %402 = vmatpush1.bf16.msra.mxu0 %v211
    %403 = vmatprep.subr.bf16.mxu0 0
    %404 = vmatpush1.bf16.msra.mxu0 %v210
    %405 = vmatprep.subr.bf16.mxu0 0
    %406 = vmatpush1.bf16.msra.mxu0 %v209
    %407 = vmatprep.subr.bf16.mxu0 0
    %408 = vmatpush1.bf16.msra.mxu0 %v208
    %409 = vmatprep.subr.bf16.mxu0 0
    %410 = vmatpush1.bf16.msra.mxu0 %v207
    %411 = vmatprep.subr.bf16.mxu0 0
    %412 = vmatpush2.bf16.msra.mxu0 0
    %413 = vmatprep.subr.bf16.mxu0 0
    %414 = vmatpush2.bf16.msra.mxu0 0
    %415 = vmatprep.subr.bf16.mxu0 0
    %416 = vmatpush2.bf16.msra.mxu0 0
    %417 = vmatprep.subr.bf16.mxu0 0
    %418 = vmatpush2.bf16.msra.mxu0 0
    %419 = vmatprep.subr.bf16.mxu0 0
    %420 = vmatpush2.bf16.msra.mxu0 0
    %421 = vmatprep.subr.bf16.mxu0 0
    %422 = vmatpush2.bf16.msra.mxu0 0
    %423 = vmatprep.subr.bf16.mxu0 0
    %424 = vmatpush2.bf16.msra.mxu0 0
    %425 = vmatprep.subr.bf16.mxu0 0
    %426 = vmatpush2.bf16.msra.mxu0 0
    %427 = vmatprep.mubr.bf16.mxu0 0
    %428 = vmatmul.mubr.bf16.gmra.mxu0 %v394
    %v429 = vpop.f32.mrf.mxu0
    %v430 = vadd.f32 0.0, %v429
    %v431 = vpop.f32.mrf.mxu0
    %v432 = vpop.f32.mrf.mxu0
    %v433 = vpop.f32.mrf.mxu0
    %434 = vdwg.mxu0
    %v435 = vadd.f32 %v145, %v430
    %v436 = vtanh.pop %v435
    %v437 = vpack.c.bf16 %v436, %v436
    %438 = vmatprep.subr.bf16.mxu0 0
    %439 = vmatpush1.bf16.msra.mxu0 %v214
    %440 = vmatprep.subr.bf16.mxu0 0
    %441 = vmatpush1.bf16.msra.mxu0 %v213
    %442 = vmatprep.subr.bf16.mxu0 0
    %443 = vmatpush1.bf16.msra.mxu0 %v212
    %444 = vmatprep.subr.bf16.mxu0 0
    %445 = vmatpush1.bf16.msra.mxu0 %v211
    %446 = vmatprep.subr.bf16.mxu0 0
    %447 = vmatpush1.bf16.msra.mxu0 %v210
    %448 = vmatprep.subr.bf16.mxu0 0
    %449 = vmatpush1.bf16.msra.mxu0 %v209
    %450 = vmatprep.subr.bf16.mxu0 0
    %451 = vmatpush1.bf16.msra.mxu0 %v208
    %452 = vmatprep.subr.bf16.mxu0 0
    %453 = vmatpush1.bf16.msra.mxu0 %v207
    %454 = vmatprep.subr.bf16.mxu0 0
    %455 = vmatpush2.bf16.msra.mxu0 0
    %456 = vmatprep.subr.bf16.mxu0 0
    %457 = vmatpush2.bf16.msra.mxu0 0
    %458 = vmatprep.subr.bf16.mxu0 0
    %459 = vmatpush2.bf16.msra.mxu0 0
    %460 = vmatprep.subr.bf16.mxu0 0
    %461 = vmatpush2.bf16.msra.mxu0 0
    %462 = vmatprep.subr.bf16.mxu0 0
    %463 = vmatpush2.bf16.msra.mxu0 0
    %464 = vmatprep.subr.bf16.mxu0 0
    %465 = vmatpush2.bf16.msra.mxu0 0
    %466 = vmatprep.subr.bf16.mxu0 0
    %467 = vmatpush2.bf16.msra.mxu0 0
    %468 = vmatprep.subr.bf16.mxu0 0
    %469 = vmatpush2.bf16.msra.mxu0 0
    %470 = vmatprep.mubr.bf16.mxu0 0
    %471 = vmatmul.mubr.bf16.gmra.mxu0 %v437
    %v472 = vpop.f32.mrf.mxu0
    %v473 = vadd.f32 0.0, %v472
    %v474 = vpop.f32.mrf.mxu0
    %v475 = vpop.f32.mrf.mxu0
    %v476 = vpop.f32.mrf.mxu0
    %477 = vdwg.mxu0
    %v478 = vadd.f32 %v148, %v473
    %v479 = vtanh.pop %v478
    %v480 = vpack.c.bf16 %v479, %v479
    %481 = vmatprep.subr.bf16.mxu0 0
    %482 = vmatpush1.bf16.msra.mxu0 %v214
    %483 = vmatprep.subr.bf16.mxu0 0
    %484 = vmatpush1.bf16.msra.mxu0 %v213
    %485 = vmatprep.subr.bf16.mxu0 0
    %486 = vmatpush1.bf16.msra.mxu0 %v212
    %487 = vmatprep.subr.bf16.mxu0 0
    %488 = vmatpush1.bf16.msra.mxu0 %v211
    %489 = vmatprep.subr.bf16.mxu0 0
    %490 = vmatpush1.bf16.msra.mxu0 %v210
    %491 = vmatprep.subr.bf16.mxu0 0
    %492 = vmatpush1.bf16.msra.mxu0 %v209
    %493 = vmatprep.subr.bf16.mxu0 0
    %494 = vmatpush1.bf16.msra.mxu0 %v208
    %495 = vmatprep.subr.bf16.mxu0 0
    %496 = vmatpush1.bf16.msra.mxu0 %v207
    %497 = vmatprep.subr.bf16.mxu0 0
    %498 = vmatpush2.bf16.msra.mxu0 0
    %499 = vmatprep.subr.bf16.mxu0 0
    %500 = vmatpush2.bf16.msra.mxu0 0
    %501 = vmatprep.subr.bf16.mxu0 0
    %502 = vmatpush2.bf16.msra.mxu0 0
    %503 = vmatprep.subr.bf16.mxu0 0
    %504 = vmatpush2.bf16.msra.mxu0 0
    %505 = vmatprep.subr.bf16.mxu0 0
    %506 = vmatpush2.bf16.msra.mxu0 0
    %507 = vmatprep.subr.bf16.mxu0 0
    %508 = vmatpush2.bf16.msra.mxu0 0
    %509 = vmatprep.subr.bf16.mxu0 0
    %510 = vmatpush2.bf16.msra.mxu0 0
    %511 = vmatprep.subr.bf16.mxu0 0
    %512 = vmatpush2.bf16.msra.mxu0 0
    %513 = vmatprep.mubr.bf16.mxu0 0
    %514 = vmatmul.mubr.bf16.gmra.mxu0 %v480
    %v515 = vpop.f32.mrf.mxu0
    %v516 = vadd.f32 0.0, %v515
    %v517 = vpop.f32.mrf.mxu0
    %v518 = vpop.f32.mrf.mxu0
    %v519 = vpop.f32.mrf.mxu0
    %520 = vdwg.mxu0
    %v521 = vadd.f32 %v153, %v516
    %v522 = vtanh.pop %v521
    %v523 = vpack.c.bf16 %v522, %v522
    %524 = vmatprep.subr.bf16.mxu0 0
    %525 = vmatpush1.bf16.msra.mxu0 %v214
    %526 = vmatprep.subr.bf16.mxu0 0
    %527 = vmatpush1.bf16.msra.mxu0 %v213
    %528 = vmatprep.subr.bf16.mxu0 0
    %529 = vmatpush1.bf16.msra.mxu0 %v212
    %530 = vmatprep.subr.bf16.mxu0 0
    %531 = vmatpush1.bf16.msra.mxu0 %v211
    %532 = vmatprep.subr.bf16.mxu0 0
    %533 = vmatpush1.bf16.msra.mxu0 %v210
    %534 = vmatprep.subr.bf16.mxu0 0
    %535 = vmatpush1.bf16.msra.mxu0 %v209
    %536 = vmatprep.subr.bf16.mxu0 0
    %537 = vmatpush1.bf16.msra.mxu0 %v208
    %538 = vmatprep.subr.bf16.mxu0 0
    %539 = vmatpush1.bf16.msra.mxu0 %v207
    %540 = vmatprep.subr.bf16.mxu0 0
    %541 = vmatpush2.bf16.msra.mxu0 0
    %542 = vmatprep.subr.bf16.mxu0 0
    %543 = vmatpush2.bf16.msra.mxu0 0
    %544 = vmatprep.subr.bf16.mxu0 0
    %545 = vmatpush2.bf16.msra.mxu0 0
    %546 = vmatprep.subr.bf16.mxu0 0
    %547 = vmatpush2.bf16.msra.mxu0 0
    %548 = vmatprep.subr.bf16.mxu0 0
    %549 = vmatpush2.bf16.msra.mxu0 0
    %550 = vmatprep.subr.bf16.mxu0 0
    %551 = vmatpush2.bf16.msra.mxu0 0
    %552 = vmatprep.subr.bf16.mxu0 0
    %553 = vmatpush2.bf16.msra.mxu0 0
    %554 = vmatprep.subr.bf16.mxu0 0
    %555 = vmatpush2.bf16.msra.mxu0 0
    %556 = vmatprep.mubr.bf16.mxu0 0
    %557 = vmatmul.mubr.bf16.gmra.mxu0 %v523
    %v558 = vpop.f32.mrf.mxu0
    %v559 = vadd.f32 0.0, %v558
    %v560 = vpop.f32.mrf.mxu0
    %v561 = vpop.f32.mrf.mxu0
    %v562 = vpop.f32.mrf.mxu0
    %563 = vdwg.mxu0
    %v564 = vadd.f32 %v156, %v559
    %v565 = vtanh.pop %v564
    %v566 = vpack.c.bf16 %v565, %v565
    %v567 = vld [vmem:[#allocation2] sm:$0xf]
    %v568 = vld [vmem:[#allocation2 + $0x4] sm:$0xf]
    %v569 = vld [vmem:[#allocation2 + $0x8] sm:$0xf]
    %v570 = vld [vmem:[#allocation2 + $0xc] sm:$0xf]
    %v571 = vld [vmem:[#allocation2 + $0x10] sm:$0xf]
    %v572 = vld [vmem:[#allocation2 + $0x14] sm:$0xf]
    %v573 = vld [vmem:[#allocation2 + $0x18] sm:$0xf]
    %v574 = vld [vmem:[#allocation2 + $0x1c] sm:$0xf]
    %v575 = vld [vmem:[#allocation2 + $0x20] sm:$0xf]
    %v576 = vld [vmem:[#allocation2 + $0x24] sm:$0xf]
    %v577 = vld [vmem:[#allocation2 + $0x28] sm:$0xf]
    %v578 = vld [vmem:[#allocation2 + $0x2c] sm:$0xf]
    %v579 = vld [vmem:[#allocation2 + $0x30] sm:$0xf]
    %v580 = vld [vmem:[#allocation2 + $0x34] sm:$0xf]
    %v581 = vld [vmem:[#allocation2 + $0x38] sm:$0xf]
    %v582 = vld [vmem:[#allocation2 + $0x3c] sm:$0xf]
    %v583 = vld [vmem:[%s5] sm:$0x1]
    %v585 = vlaneseq
    %v586 = vshrl.u32 %v585, 7
    %v587 = vsub.s32 0, %v586
    %v588 = vrot.slane %v583, %v587
    %v606 = vunpack.c.l.b16 %v567
    %v607 = vunpack.c.l.b16 %v568
    %v608 = vunpack.c.l.b16 %v569
    %v609 = vunpack.c.l.b16 %v570
    %v610 = vunpack.c.l.b16 %v571
    %v611 = vunpack.c.l.b16 %v572
    %v612 = vunpack.c.l.b16 %v573
    %v613 = vunpack.c.l.b16 %v574
    %v614 = vunpack.c.l.b16 %v575
    %v615 = vunpack.c.l.b16 %v576
    %v616 = vunpack.c.l.b16 %v577
    %v617 = vunpack.c.l.b16 %v578
    %v618 = vunpack.c.l.b16 %v579
    %v619 = vunpack.c.l.b16 %v580
    %v620 = vunpack.c.l.b16 %v581
    %v621 = vunpack.c.l.b16 %v582
    %v622 = vpack.c.b16 %v607, %v606
    %v623 = vpack.c.b16 %v609, %v608
    %v624 = vpack.c.b16 %v611, %v610
    %v625 = vpack.c.b16 %v613, %v612
    %v626 = vpack.c.b16 %v615, %v614
    %v627 = vpack.c.b16 %v617, %v616
    %v628 = vpack.c.b16 %v619, %v618
    %v629 = vpack.c.b16 %v621, %v620
    %638 = vmatprep.subr.bf16.mxu0 0
    %639 = vmatpush1.bf16.msra.mxu0 %v629
    %640 = vmatprep.subr.bf16.mxu0 0
    %641 = vmatpush1.bf16.msra.mxu0 %v628
    %642 = vmatprep.subr.bf16.mxu0 0
    %643 = vmatpush1.bf16.msra.mxu0 %v627
    %644 = vmatprep.subr.bf16.mxu0 0
    %645 = vmatpush1.bf16.msra.mxu0 %v626
    %646 = vmatprep.subr.bf16.mxu0 0
    %647 = vmatpush1.bf16.msra.mxu0 %v625
    %648 = vmatprep.subr.bf16.mxu0 0
    %649 = vmatpush1.bf16.msra.mxu0 %v624
    %650 = vmatprep.subr.bf16.mxu0 0
    %651 = vmatpush1.bf16.msra.mxu0 %v623
    %652 = vmatprep.subr.bf16.mxu0 0
    %653 = vmatpush1.bf16.msra.mxu0 %v622
    %654 = vmatprep.subr.bf16.mxu0 0
    %655 = vmatpush2.bf16.msra.mxu0 0
    %656 = vmatprep.subr.bf16.mxu0 0
    %657 = vmatpush2.bf16.msra.mxu0 0
    %658 = vmatprep.subr.bf16.mxu0 0
    %659 = vmatpush2.bf16.msra.mxu0 0
    %660 = vmatprep.subr.bf16.mxu0 0
    %661 = vmatpush2.bf16.msra.mxu0 0
    %662 = vmatprep.subr.bf16.mxu0 0
    %663 = vmatpush2.bf16.msra.mxu0 0
    %664 = vmatprep.subr.bf16.mxu0 0
    %665 = vmatpush2.bf16.msra.mxu0 0
    %666 = vmatprep.subr.bf16.mxu0 0
    %667 = vmatpush2.bf16.msra.mxu0 0
    %668 = vmatprep.subr.bf16.mxu0 0
    %669 = vmatpush2.bf16.msra.mxu0 0
    %670 = vmatprep.mubr.bf16.mxu0 0
    %671 = vmatmul.mubr.bf16.gmra.mxu0 %v566
    %v672 = vpop.f32.mrf.mxu0
    %v673 = vadd.f32 %v588, %v672
    %v674 = vpop.f32.mrf.mxu0
    %v675 = vpop.f32.mrf.mxu0
    %v676 = vpop.f32.mrf.mxu0
    %677 = vdwg.mxu0
    %678 = vst [vmem:[%s6] sm:$0xff] %v673
    // Predicated region
    $region30: #{textrnn_forward.1} parent=1 // pred_check
      _
    $region31: #{textrnn_forward.1} parent=1 // pred_check_branch
      %680 = sbr.rel (0) target = $region33
    $region32: #{textrnn_forward.1} parent=1 // pred_region
      _
    $region33: #{textrnn_forward.1} parent=1 // pred_fallthru
      _
    // Predicated region
    $region34: #{textrnn_forward.1} parent=1 // pred_check
      _
    $region35: #{textrnn_forward.1} parent=1 // pred_check_branch
      %682 = sbr.rel (0) target = $region37
    $region36: #{textrnn_forward.1} parent=1 // pred_region
      _
    $region37: #{textrnn_forward.1} parent=1 // pred_fallthru
      _
    %683 = vsyncpa [#allocation3], 1

</llo_original>
